<compile_context>
chip_gen: v7x
topology: tpu7x:2x2x1
jax: 0.10.0
libtpu: 0.0.40
codegen_flags: <defaults>
</compile_context>

<pallas_src>
import functools

import jax
import jax.numpy as jnp
from jax.experimental import pallas as pl
from jax.experimental.pallas import tpu as pltpu


def _round_up(n, m):
    return ((n + m - 1) // m) * m


# -----------------------------------------------------------------------------
# Fused kernel: pool + MLP + scale in a single HBM pass (1 read + 1 write of x).
# -----------------------------------------------------------------------------
def _ca_fused_kernel(x_ref, w1_ref, b1_ref, w2_ref, b2_ref, o_ref, *, inv_hw, tb, c):
    """x_ref/o_ref: (TB*C, HW) slab; channels on sublanes, spatial on lanes.

    w1_ref: (C_sq_pad, C), b1_ref: (C_sq_pad, 1), w2_ref: (C, C_sq_pad),
    b2_ref: (C, 1) -- shared by all batch elements (constant index_map, so the
    pipeline fetches them once, not per grid step).
    """
    w1 = w1_ref[...]
    b1 = b1_ref[...]
    w2 = w2_ref[...]
    b2 = b2_ref[...]

    for t in range(tb):                       # static unroll; TB is small
        rows = pl.ds(t * c, c)                # static start -> zero-cost slice
        # Global average pool over the spatial (lane) axis: VPU adds + one XLU
        # cross-lane reduce.  The block spans the full HW, so the mean is exact
        # with no padding or masking.
        p = jnp.sum(x_ref[rows, :], axis=-1, keepdims=True,
                    dtype=jnp.float32) * inv_hw                       # (C, 1)
        # Squeeze (1x1 conv) + ReLU, then excite (1x1 conv) + sigmoid.
        z = jnp.dot(w1, p, preferred_element_type=jnp.float32) + b1
        z = jnp.maximum(z, 0.0)                                       # (C_sq_pad, 1)
        s = jnp.dot(w2, z, preferred_element_type=jnp.float32) + b2
        s = jax.nn.sigmoid(s)                                         # (C, 1)
        # Per-channel scale in the input dtype (no full-slab f32 upcast).  The
        # sub-slab is re-read from VMEM (vld slots are plentiful) instead of
        # holding one long-lived value across both the reduce and the multiply.
        o_ref[rows, :] = x_ref[rows, :] * s.astype(o_ref.dtype)


# -----------------------------------------------------------------------------
# Spatial-split path kernels (large images): pool pass + scale pass.
# -----------------------------------------------------------------------------
def _pool_kernel(x_ref, o_ref, *, hw, t_hw, inv_hw):
    """Partial spatial sums accumulated into a resident (C, 1) f32 output."""
    j = pl.program_id(1)

    @pl.when(j == 0)
    def _():
        o_ref[...] = jnp.zeros_like(o_ref)

    x = x_ref[...]
    if hw % t_hw != 0:
        # Mask the ragged tail chunk (out-of-bounds reads are undefined).
        col = jax.lax.broadcasted_iota(jnp.int32, x.shape, 1) + j * t_hw
        x = jnp.where(col < hw, x, jnp.zeros_like(x))
    o_ref[...] += jnp.sum(x, axis=-1, keepdims=True, dtype=jnp.float32)

    @pl.when(j == pl.num_programs(1) - 1)
    def _():
        o_ref[...] *= inv_hw


def _scale_kernel(x_ref, s_ref, o_ref):
    # Out-of-bounds columns of a ragged tail block are discarded on writeback.
    o_ref[...] = x_ref[...] * s_ref[...].astype(o_ref.dtype)


# -----------------------------------------------------------------------------
# Tiling heuristics (generation aware).
# -----------------------------------------------------------------------------
def _vmem_params():
    """Returns (scoped-VMEM budget bytes, per-block byte target)."""
    try:
        cap = int(pltpu.get_tpu_info().vmem_capacity_bytes)
    except Exception:
        cap = 64 << 20                        # conservative fallback (v7x per-TC)
    budget = min(cap // 2, 64 << 20)          # v7x: 32 MiB, v5e/v6e: 64 MiB
    kind = ""
    try:
        kind = jax.devices()[0].device_kind.lower()
    except Exception:
        pass
    # ~8 MiB blocks on v6e (128 MiB VMEM); ~4 MiB on v7x (64 MiB/TC) and v5e.
    if "v6" in kind and cap >= (96 << 20):
        block_target = 8 << 20
    else:
        block_target = 4 << 20
    return budget, block_target


def _pick_batch_tile(B, per_batch_bytes, block_target):
    """Largest TB (divisor of B) whose block stays under the byte target while
    preferring >= 8 grid steps (>= 4 per TensorCore on v7x) so in/out DMAs of
    adjacent steps overlap; fall back to >= 2 steps before a single step."""
    divisors = [t for t in range(1, B + 1) if B % t == 0]
    fitting = [t for t in divisors if t * per_batch_bytes <= block_target]
    if not fitting:
        return 1
    cand8 = [t for t in fitting if B // t >= 8]
    if cand8 and max(cand8) * per_batch_bytes >= (512 << 10):
        return max(cand8)
    cand2 = [t for t in fitting if B // t >= 2]
    if cand2:
        return max(cand2)
    return max(fitting)


# -----------------------------------------------------------------------------
# Wrapper.
# -----------------------------------------------------------------------------
def channel_attention(x, w1, b1, w2, b2, *, force_split=False, spatial_tile=None):
    """x: (B, C, H, W); w1: (C//sq, C); b1: (C//sq,); w2: (C, C//sq); b2: (C,)."""
    B, C_in, H, W = x.shape
    HW = H * W
    inv_hw = 1.0 / HW
    itemsize = jnp.dtype(x.dtype).itemsize

    # Sublane alignment: pad channels to a multiple of 8 only if needed.
    # Padded channels pool to 0 and their padded w2 rows / b2 entries are 0,
    # so their (zero) outputs are sliced off below.
    C = C_in
    if C % 8 != 0:
        # TODO(synk): for some (B, C) a batch tile with (TB*C) % 8 == 0 exists
        # and would avoid this extra HBM pad pass.
        Cp = _round_up(C, 8)
        x = jnp.pad(x, ((0, 0), (0, Cp - C), (0, 0), (0, 0)))
        w1 = jnp.pad(w1, ((0, 0), (0, Cp - C)))
        w2 = jnp.pad(w2, ((0, Cp - C), (0, 0)))
        b2 = jnp.pad(b2, ((0, Cp - C),))
        C = Cp

    C_sq = w1.shape[0]
    C_sqp = _round_up(C_sq, 8)                # keep matmul sublane dims >= 8
    w1p = jnp.pad(w1, ((0, C_sqp - C_sq), (0, 0)))
    b1p = jnp.pad(b1, ((0, C_sqp - C_sq),)).reshape(C_sqp, 1)
    w2p = jnp.pad(w2, ((0, 0), (0, C_sqp - C_sq)))
    b2c = b2.reshape(C, 1)

    budget, block_target = _vmem_params()
    per_batch = C * HW * itemsize
    x_flat = x.reshape(B * C, HW)             # free: contiguous view, no HBM pass

    use_split = (force_split or per_batch > budget // 4) and HW >= 128

    if not use_split:
        # ---------------- fused single-pass path ----------------
        TB = _pick_batch_tile(B, per_batch, block_target)
        grid = (B // TB,)
        kernel = functools.partial(_ca_fused_kernel, inv_hw=inv_hw, tb=TB, c=C)
        cost = pl.CostEstimate(
            flops=int(3 * B * C * HW + 4 * B * C * C_sq),
            transcendentals=int(B * C),
            bytes_accessed=int(2 * B * C * HW * itemsize
                               + (w1p.size + b1p.size + w2p.size + b2c.size) * itemsize),
        )
        out_flat = pl.pallas_call(
            kernel,
            out_shape=jax.ShapeDtypeStruct((B * C, HW), x.dtype),
            grid_spec=pltpu.PrefetchScalarGridSpec(
                num_scalar_prefetch=0,
                grid=grid,
                in_specs=[
                    # Last block dim == full HW: no wrapper pad / output slice.
                    pl.BlockSpec((TB * C, HW), lambda i: (i, 0)),
                    pl.BlockSpec((C_sqp, C), lambda i: (0, 0)),
                    pl.BlockSpec((C_sqp, 1), lambda i: (0, 0)),
                    pl.BlockSpec((C, C_sqp), lambda i: (0, 0)),
                    pl.BlockSpec((C, 1), lambda i: (0, 0)),
                ],
                out_specs=pl.BlockSpec((TB * C, HW), lambda i: (i, 0)),
            ),
            compiler_params=pltpu.CompilerParams(
                dimension_semantics=("parallel",),
                vmem_limit_bytes=budget,
            ),
            cost_estimate=cost,
        )(x_flat, w1p, b1p, w2p, b2c)
    else:
        # ---------------- spatial-split path (large HW) ----------------
        if spatial_tile is not None:
            T_HW = spatial_tile
        else:
            T_HW = max(128, min((block_target // (C * itemsize)) // 128 * 128,
                                (HW // 128) * 128))
        n_sp = pl.cdiv(HW, T_HW)
        grid = (B, n_sp)                      # TB = 1: spatial axis supplies steps

        pooled = pl.pallas_call(
            functools.partial(_pool_kernel, hw=HW, t_hw=T_HW, inv_hw=inv_hw),
            out_shape=jax.ShapeDtypeStruct((B * C, 1), jnp.float32),
            grid_spec=pltpu.PrefetchScalarGridSpec(
                num_scalar_prefetch=0,
                grid=grid,
                in_specs=[pl.BlockSpec((C, T_HW), lambda i, j: (i, j))],
                out_specs=pl.BlockSpec((C, 1), lambda i, j: (i, 0)),
            ),
            compiler_params=pltpu.CompilerParams(
                dimension_semantics=("parallel", "arbitrary"),
                vmem_limit_bytes=budget,
            ),
        )(x_flat)

        # Tiny per-batch MLP (negligible flops): plain XLA.
        p_bc = pooled.reshape(B, C)
        z = jnp.maximum(p_bc @ w1.T + b1, 0.0)
        s_bc = jax.nn.sigmoid(z @ w2.T + b2).astype(jnp.float32)
        s_col = s_bc.reshape(B * C, 1)

        out_flat = pl.pallas_call(
            _scale_kernel,
            out_shape=jax.ShapeDtypeStruct((B * C, HW), x.dtype),
            grid_spec=pltpu.PrefetchScalarGridSpec(
                num_scalar_prefetch=0,
                grid=grid,
                in_specs=[
                    pl.BlockSpec((C, T_HW), lambda i, j: (i, j)),
                    pl.BlockSpec((C, 1), lambda i, j: (i, 0)),
                ],
                out_specs=pl.BlockSpec((C, T_HW), lambda i, j: (i, j)),
            ),
            compiler_params=pltpu.CompilerParams(
                dimension_semantics=("parallel", "parallel"),
                vmem_limit_bytes=budget,
            ),
        )(x_flat, s_col)

    out = out_flat.reshape(B, C, H, W)
    if C != C_in:
        out = out[:, :C_in]
    return out


def reference(x, w1, b1, w2, b2):
    """Pure-JAX reference for correctness check."""
    pooled = jnp.mean(x, axis=(2, 3))                       # (B, C)
    z = jnp.maximum(pooled @ w1.T + b1, 0.0)                # (B, C_sq)
    s = jax.nn.sigmoid(z @ w2.T + b2)                       # (B, C)
    return x * s[:, :, None, None]


def _run_case(key, B, C, H, W, squeeze_factor, **kwargs):
    C_sq = C // squeeze_factor
    kx, kw1, kb1, kw2, kb2 = jax.random.split(key, 5)
    x = jax.random.normal(kx, (B, C, H, W), dtype=jnp.float32)
    # 1x1 conv weights (kernel spatial dims squeezed out): (out_ch, in_ch)
    w1 = jax.random.normal(kw1, (C_sq, C), dtype=jnp.float32) * 0.1
    b1 = jax.random.normal(kb1, (C_sq,), dtype=jnp.float32) * 0.1
    w2 = jax.random.normal(kw2, (C, C_sq), dtype=jnp.float32) * 0.1
    b2 = jax.random.normal(kb2, (C,), dtype=jnp.float32) * 0.1

    out = jax.block_until_ready(channel_attention(x, w1, b1, w2, b2, **kwargs))
    ref = reference(x, w1, b1, w2, b2)
    assert out.shape == (B, C, H, W)
    err = jnp.max(jnp.abs(out - ref))
    assert jnp.allclose(out, ref, atol=2e-5, rtol=2e-5), f"mismatch vs reference: {err}"


if __name__ == "__main__":
    key = jax.random.PRNGKey(0)
    k1, k2, k3 = jax.random.split(key, 3)
    # Module config: num_feat=32, squeeze_factor=8 -> squeezed channels = 4.
    _run_case(k1, B=2, C=32, H=16, W=16, squeeze_factor=8)   # fused, HW=256 aligned
    _run_case(k2, B=4, C=32, H=10, W=10, squeeze_factor=8)   # fused, HW=100 (no pad/slice)
    # Exercise the spatial-split path (pool pass + XLA MLP + scale pass).
    _run_case(k3, B=2, C=32, H=16, W=16, squeeze_factor=8,
              force_split=True, spatial_tile=128)
    print("KERNEL_OK")
</pallas_src>

<mosaic_0001>
module attributes {stable_mosaic.version = 11 : i64} {
  func.func @_ca_fused_kernel(%arg0: i32, %arg1: memref<32x256xf32, #tpu.memory_space<vmem>>, %arg2: memref<8x32xf32, #tpu.memory_space<vmem>>, %arg3: memref<8x1xf32, #tpu.memory_space<vmem>>, %arg4: memref<32x8xf32, #tpu.memory_space<vmem>>, %arg5: memref<32x1xf32, #tpu.memory_space<vmem>>, %arg6: memref<32x256xf32, #tpu.memory_space<vmem>>) attributes {dimension_semantics = [#tpu.dimension_semantics<parallel>], iteration_bounds = array<i64: 2>, scalar_prefetch = 0 : i64, scratch_operands = 0 : i64, tpu.core_type = #tpu.core_type<tc>, window_params = [{transform_indices = @transform_0, window_bounds = array<i64: 32, 256>}, {pipeline_mode = #tpu.pipeline_mode<synchronous>, transform_indices = @transform_1, window_bounds = array<i64: 8, 32>}, {pipeline_mode = #tpu.pipeline_mode<synchronous>, transform_indices = @transform_2, window_bounds = array<i64: 8, 1>}, {pipeline_mode = #tpu.pipeline_mode<synchronous>, transform_indices = @transform_3, window_bounds = array<i64: 32, 8>}, {pipeline_mode = #tpu.pipeline_mode<synchronous>, transform_indices = @transform_4, window_bounds = array<i64: 32, 1>}, {transform_indices = @transform_5, window_bounds = array<i64: 32, 256>}]} {
    %c0 = arith.constant 0 : index
    %c0_0 = arith.constant 0 : index
    %0 = vector.load %arg2[%c0, %c0_0] : memref<8x32xf32, #tpu.memory_space<vmem>>, vector<8x32xf32>
    %c0_1 = arith.constant 0 : index
    %c0_2 = arith.constant 0 : index
    %1 = vector.load %arg3[%c0_1, %c0_2] : memref<8x1xf32, #tpu.memory_space<vmem>>, vector<8x1xf32>
    %c0_3 = arith.constant 0 : index
    %c0_4 = arith.constant 0 : index
    %2 = vector.load %arg4[%c0_3, %c0_4] : memref<32x8xf32, #tpu.memory_space<vmem>>, vector<32x8xf32>
    %c0_5 = arith.constant 0 : index
    %c0_6 = arith.constant 0 : index
    %3 = vector.load %arg5[%c0_5, %c0_6] : memref<32x1xf32, #tpu.memory_space<vmem>>, vector<32x1xf32>
    %c0_7 = arith.constant 0 : index
    %c0_8 = arith.constant 0 : index
    %4 = vector.load %arg1[%c0_7, %c0_8] : memref<32x256xf32, #tpu.memory_space<vmem>>, vector<32x256xf32>
    %cst = arith.constant dense<0.000000e+00> : vector<32xf32>
    %5 = vector.multi_reduction <add>, %4, %cst [1] : vector<32x256xf32> to vector<32xf32>
    %6 = vector.shape_cast %5 : vector<32xf32> to vector<32x1xf32>
    %cst_9 = arith.constant 3.906250e-03 : f32
    %7 = vector.broadcast %cst_9 : f32 to vector<32x1xf32>
    %8 = arith.mulf %6, %7 : vector<32x1xf32>
    %cst_10 = arith.constant dense<0.000000e+00> : vector<8x1xf32>
    %9 = tpu.matmul %0, %8, %cst_10 {dimension_numbers = #tpu.dot_dimension_numbers<[1], [0], [0], [1], [0, 0, 1, 1], [], []>} : vector<8x32xf32>, vector<32x1xf32>, vector<8x1xf32> -> vector<8x1xf32>
    %10 = arith.addf %9, %1 : vector<8x1xf32>
    %cst_11 = arith.constant 0.000000e+00 : f32
    %11 = vector.broadcast %cst_11 : f32 to vector<8x1xf32>
    %12 = arith.maximumf %10, %11 : vector<8x1xf32>
    %cst_12 = arith.constant dense<0.000000e+00> : vector<32x1xf32>
    %13 = tpu.matmul %2, %12, %cst_12 {dimension_numbers = #tpu.dot_dimension_numbers<[1], [0], [0], [1], [0, 0, 1, 1], [], []>} : vector<32x8xf32>, vector<8x1xf32>, vector<32x1xf32> -> vector<32x1xf32>
    %14 = arith.addf %13, %3 : vector<32x1xf32>
    %15 = arith.negf %14 : vector<32x1xf32>
    %16 = math.exp %15 : vector<32x1xf32>
    %cst_13 = arith.constant 1.000000e+00 : f32
    %17 = vector.broadcast %cst_13 : f32 to vector<32x1xf32>
    %18 = arith.addf %17, %16 : vector<32x1xf32>
    %19 = arith.divf %17, %18 : vector<32x1xf32>
    %c0_14 = arith.constant 0 : index
    %c0_15 = arith.constant 0 : index
    %20 = vector.load %arg1[%c0_14, %c0_15] : memref<32x256xf32, #tpu.memory_space<vmem>>, vector<32x256xf32>
    %21 = vector.broadcast %19 : vector<32x1xf32> to vector<32x256xf32>
    %22 = arith.mulf %20, %21 : vector<32x256xf32>
    %c0_16 = arith.constant 0 : index
    %c0_17 = arith.constant 0 : index
    %23 = vector.load %arg6[%c0_16, %c0_17] : memref<32x256xf32, #tpu.memory_space<vmem>>, vector<32x256xf32>
    tpu.vector_store %arg6[%c0_16, %c0_17], %22 {strides = array<i32>} : memref<32x256xf32, #tpu.memory_space<vmem>>, vector<32x256xf32>,
    return
  }
  func.func @transform_0(%arg0: i32) -> (i32, i32) {
    %c0_i32 = arith.constant 0 : i32
    %c0_i32_0 = arith.constant 0 : i32
    return %arg0, %c0_i32 : i32, i32
  }
  func.func @transform_1(%arg0: i32) -> (i32, i32) {
    %c0_i32 = arith.constant 0 : i32
    %c0_i32_0 = arith.constant 0 : i32
    %c0_i32_1 = arith.constant 0 : i32
    return %c0_i32, %c0_i32_0 : i32, i32
  }
  func.func @transform_2(%arg0: i32) -> (i32, i32) {
    %c0_i32 = arith.constant 0 : i32
    %c0_i32_0 = arith.constant 0 : i32
    %c0_i32_1 = arith.constant 0 : i32
    return %c0_i32, %c0_i32_0 : i32, i32
  }
  func.func @transform_3(%arg0: i32) -> (i32, i32) {
    %c0_i32 = arith.constant 0 : i32
    %c0_i32_0 = arith.constant 0 : i32
    %c0_i32_1 = arith.constant 0 : i32
    return %c0_i32, %c0_i32_0 : i32, i32
  }
  func.func @transform_4(%arg0: i32) -> (i32, i32) {
    %c0_i32 = arith.constant 0 : i32
    %c0_i32_0 = arith.constant 0 : i32
    %c0_i32_1 = arith.constant 0 : i32
    return %c0_i32, %c0_i32_0 : i32, i32
  }
  func.func @transform_5(%arg0: i32) -> (i32, i32) {
    %c0_i32 = arith.constant 0 : i32
    %c0_i32_0 = arith.constant 0 : i32
    return %arg0, %c0_i32 : i32, i32
  }
}

</mosaic_0001>

<llo_original>
// kernel: tpu_custom_call.1
$region0: #{tpu_custom_call.1}
  #allocation0 [shape = 'u32[]', space=smem, size = 0x4, offset = 0x4, fixed_abs, tag = 'smem constant byte address 0x4 - core index']
  #allocation1 [shape = 'u32[144,128]{1,0:T(1,128)}', space=vmem, size = 0x12000, scoped, tag = 'internal scratch']
  %s0 = inlined_call_operand.hbm [shape: f32[64,256], index: 0, kind: input, shape index: {}]
  %s1 = inlined_call_operand.vmem [shape: f32[8,32], index: 1, kind: input, shape index: {}]
  %s2 = inlined_call_operand.vmem [shape: f32[8,1], index: 2, kind: input, shape index: {}]
  %s3 = inlined_call_operand.vmem [shape: f32[32,8], index: 3, kind: input, shape index: {}]
  %s4 = inlined_call_operand.vmem [shape: f32[32,1], index: 4, kind: input, shape index: {}]
  %s5 = inlined_call_operand.hbm [shape: f32[64,256], index: 5, kind: output, shape index: {}]
  %s6 = sld [smem:[#allocation0]]
  $region57: #{tpu_custom_call.1} parent=0
    _
  %s8 = ssub.s32 1, %s6
  %s9 = scalar_select 0, %s8, %s6
  $region1: #{tpu_custom_call.1} parent=0
    #allocation2 [shape = 'u8[65536]{0}', space=vmem, size = 0x10000, scoped, tag = 'input window, operand 0']
    #allocation3 [shape = 's32[2]{0}', space=sflag, size = 0x8, scoped, tag = 'scoped memory for tpu_custom_call.1']
    #allocation4 [shape = 's32[2]{0}', space=sflag, size = 0x8, scoped, tag = 'scoped memory for tpu_custom_call.1']
    #allocation5 [shape = 'u8[65536]{0}', space=vmem, size = 0x10000, scoped, tag = 'output window, operand 0']
    %10 = vsyncpa [#allocation3], 0
    %s11 = scalar_lea.sflag [#allocation3], 1
    %12 = vsyncpa %s11, 0
    %13 = vsyncpa [#allocation4], 0
    %s14 = scalar_lea.sflag [#allocation4], 1
    %15 = vsyncpa %s14, 0
    loop: start=0, step=1, limit=4
    $region2: #{tpu_custom_call.1} parent=1 // loop_pre_header
      _
    $region3: #{tpu_custom_call.1} parent=1 // loop_header
      %s17 = sphi 0, %s21
      %p18 = scmp.ge.s32.totalorder %s17, 4
      %s27 = sphi 0, %s29
      %s30 = sphi 0, %s27
      %s31 = sphi 0, %s30
      %s47 = sphi 0, %s31
      %s51 = sphi 0, %s51
      %s53 = sphi 0, %s51
      %s54 = sphi 0, %s53
      %s68 = sphi 0, %s54
      %s72 = sphi 0, %s72
      %s74 = sphi 0, %s72
      %s75 = sphi 0, %s74
      %s89 = sphi 0, %s75
      %s93 = sphi 0, %s93
      %s95 = sphi 0, %s93
      %s96 = sphi 0, %s95
      %s110 = sphi 0, %s96
      %s114 = sphi 0, %s114
      %s116 = sphi 0, %s114
      %s117 = sphi 0, %s116
      %s131 = sphi 0, %s117
      %s137 = sphi 0, %s139
      %s140 = sphi 0, %s137
      %s141 = sphi 0, %s140
      %s157 = sphi 0, %s141
    $region4: #{tpu_custom_call.1} parent=1 // loop_header_branch
      %20 = sbr.rel (%p18) target = $region8
    $region5: #{tpu_custom_call.1} parent=1 // loop_body
      %s22 = ssub.s32 %s17, 1
      %s23 = ssub.s32 %s17, 2
      %s24 = sadd.s32 %s17, 1
      %s25 = ssub.s32 %s17, %s24
      %p26 = scmp.eq.s32.totalorder %s25, 0
      %s28 = sadd.s32 %s27, 1
      %s29 = scalar_select %p26, %s27, %s28
      %p32 = pneg %p26
      %p33 = scmp.eq.s32.totalorder %s17, 1
      %p34 = por %p32, %p33
      %p35 = scmp.ne.s32.totalorder %s27, %s30
      %p36 = scmp.eq.s32.totalorder %s17, 0
      %p37 = por %p35, %p36
      %p38 = scmp.ne.s32.totalorder %s27, %s30
      %p39 = scmp.eq.s32.totalorder %s22, 1
      %p40 = por %p38, %p39
      %p41 = scmp.ne.s32.totalorder %s30, %s31
      %p42 = scmp.eq.s32.totalorder %s22, 0
      %p43 = por %p41, %p42
      %p44 = scmp.ne.s32.totalorder %s30, %s31
      %p45 = scmp.eq.s32.totalorder %s23, 1
      %p46 = por %p44, %p45
      %p48 = scmp.ne.s32.totalorder %s31, %s47
      %p49 = scmp.eq.s32.totalorder %s23, 0
      %p50 = por %p48, %p49
      %s52 = sadd.s32 %s51, 1
      %p55 = scmp.eq.s32.totalorder %s17, 1
      %p56 = scmp.ne.s32.totalorder %s51, %s53
      %p57 = scmp.eq.s32.totalorder %s17, 0
      %p58 = por %p56, %p57
      %p59 = scmp.ne.s32.totalorder %s51, %s53
      %p60 = scmp.eq.s32.totalorder %s22, 1
      %p61 = por %p59, %p60
      %p62 = scmp.ne.s32.totalorder %s53, %s54
      %p63 = scmp.eq.s32.totalorder %s22, 0
      %p64 = por %p62, %p63
      %p65 = scmp.ne.s32.totalorder %s53, %s54
      %p66 = scmp.eq.s32.totalorder %s23, 1
      %p67 = por %p65, %p66
      %p69 = scmp.ne.s32.totalorder %s54, %s68
      %p70 = scmp.eq.s32.totalorder %s23, 0
      %p71 = por %p69, %p70
      %s73 = sadd.s32 %s72, 1
      %p76 = scmp.eq.s32.totalorder %s17, 1
      %p77 = scmp.ne.s32.totalorder %s72, %s74
      %p78 = scmp.eq.s32.totalorder %s17, 0
      %p79 = por %p77, %p78
      %p80 = scmp.ne.s32.totalorder %s72, %s74
      %p81 = scmp.eq.s32.totalorder %s22, 1
      %p82 = por %p80, %p81
      %p83 = scmp.ne.s32.totalorder %s74, %s75
      %p84 = scmp.eq.s32.totalorder %s22, 0
      %p85 = por %p83, %p84
      %p86 = scmp.ne.s32.totalorder %s74, %s75
      %p87 = scmp.eq.s32.totalorder %s23, 1
      %p88 = por %p86, %p87
      %p90 = scmp.ne.s32.totalorder %s75, %s89
      %p91 = scmp.eq.s32.totalorder %s23, 0
      %p92 = por %p90, %p91
      %s94 = sadd.s32 %s93, 1
      %p97 = scmp.eq.s32.totalorder %s17, 1
      %p98 = scmp.ne.s32.totalorder %s93, %s95
      %p99 = scmp.eq.s32.totalorder %s17, 0
      %p100 = por %p98, %p99
      %p101 = scmp.ne.s32.totalorder %s93, %s95
      %p102 = scmp.eq.s32.totalorder %s22, 1
      %p103 = por %p101, %p102
      %p104 = scmp.ne.s32.totalorder %s95, %s96
      %p105 = scmp.eq.s32.totalorder %s22, 0
      %p106 = por %p104, %p105
      %p107 = scmp.ne.s32.totalorder %s95, %s96
      %p108 = scmp.eq.s32.totalorder %s23, 1
      %p109 = por %p107, %p108
      %p111 = scmp.ne.s32.totalorder %s96, %s110
      %p112 = scmp.eq.s32.totalorder %s23, 0
      %p113 = por %p111, %p112
      %s115 = sadd.s32 %s114, 1
      %p118 = scmp.eq.s32.totalorder %s17, 1
      %p119 = scmp.ne.s32.totalorder %s114, %s116
      %p120 = scmp.eq.s32.totalorder %s17, 0
      %p121 = por %p119, %p120
      %p122 = scmp.ne.s32.totalorder %s114, %s116
      %p123 = scmp.eq.s32.totalorder %s22, 1
      %p124 = por %p122, %p123
      %p125 = scmp.ne.s32.totalorder %s116, %s117
      %p126 = scmp.eq.s32.totalorder %s22, 0
      %p127 = por %p125, %p126
      %p128 = scmp.ne.s32.totalorder %s116, %s117
      %p129 = scmp.eq.s32.totalorder %s23, 1
      %p130 = por %p128, %p129
      %p132 = scmp.ne.s32.totalorder %s117, %s131
      %p133 = scmp.eq.s32.totalorder %s23, 0
      %p134 = por %p132, %p133
      %s135 = ssub.s32 %s17, %s24
      %p136 = scmp.eq.s32.totalorder %s135, 0
      %s138 = sadd.s32 %s137, 1
      %s139 = scalar_select %p136, %s137, %s138
      %p142 = pneg %p136
      %p143 = scmp.eq.s32.totalorder %s17, 1
      %p144 = por %p142, %p143
      %p145 = scmp.ne.s32.totalorder %s137, %s140
      %p146 = scmp.eq.s32.totalorder %s17, 0
      %p147 = por %p145, %p146
      %p148 = scmp.ne.s32.totalorder %s137, %s140
      %p149 = scmp.eq.s32.totalorder %s22, 1
      %p150 = por %p148, %p149
      %p151 = scmp.ne.s32.totalorder %s140, %s141
      %p152 = scmp.eq.s32.totalorder %s22, 0
      %p153 = por %p151, %p152
      %p154 = scmp.ne.s32.totalorder %s140, %s141
      %p155 = scmp.eq.s32.totalorder %s23, 1
      %p156 = por %p154, %p155
      %p158 = scmp.ne.s32.totalorder %s141, %s157
      %p159 = scmp.eq.s32.totalorder %s23, 0
      %p160 = por %p158, %p159
      %p161 = scmp.le.s32.totalorder 1, %s17
      %p162 = scmp.lt.s32.totalorder %s17, 3
      %p163 = pnand %p161, %p162
      %p164 = pneg %p163
      // Predicated region
      $region9: #{tpu_custom_call.1} parent=5 // pred_check
        _
      $region10: #{tpu_custom_call.1} parent=5 // pred_check_branch
        %166 = sbr.rel (%p163) target = $region12
      $region11: #{tpu_custom_call.1} parent=5 // pred_region
        %s167 = ssub.s32 %s17, 1
        // Predicated region
        $region13: #{tpu_custom_call.1} parent=11 // pred_check
          %p168 = pneg %p64
        $region14: #{tpu_custom_call.1} parent=11 // pred_check_branch
          %170 = sbr.rel (%p168) target = $region16
        $region15: #{tpu_custom_call.1} parent=11 // pred_region
          _
        $region16: #{tpu_custom_call.1} parent=11 // pred_fallthru
          _
        // Predicated region
        $region17: #{tpu_custom_call.1} parent=11 // pred_check
          %p171 = pneg %p85
        $region18: #{tpu_custom_call.1} parent=11 // pred_check_branch
          %173 = sbr.rel (%p171) target = $region20
        $region19: #{tpu_custom_call.1} parent=11 // pred_region
          _
        $region20: #{tpu_custom_call.1} parent=11 // pred_fallthru
          _
        // Predicated region
        $region21: #{tpu_custom_call.1} parent=11 // pred_check
          %p174 = pneg %p106
        $region22: #{tpu_custom_call.1} parent=11 // pred_check_branch
          %176 = sbr.rel (%p174) target = $region24
        $region23: #{tpu_custom_call.1} parent=11 // pred_region
          _
        $region24: #{tpu_custom_call.1} parent=11 // pred_fallthru
          _
        // Predicated region
        $region25: #{tpu_custom_call.1} parent=11 // pred_check
          %p177 = pneg %p127
        $region26: #{tpu_custom_call.1} parent=11 // pred_check_branch
          %179 = sbr.rel (%p177) target = $region28
        $region27: #{tpu_custom_call.1} parent=11 // pred_region
          _
        $region28: #{tpu_custom_call.1} parent=11 // pred_fallthru
          _
      $region12: #{tpu_custom_call.1} parent=5 // pred_fallthru
        _
      %p180 = scmp.lt.s32.totalorder %s17, 2
      // Predicated region
      $region29: #{tpu_custom_call.1} parent=5 // pred_check
        %p181 = pneg %p180
      $region30: #{tpu_custom_call.1} parent=5 // pred_check_branch
        %183 = sbr.rel (%p181) target = $region32
      $region31: #{tpu_custom_call.1} parent=5 // pred_region
        // Predicated region
        $region33: #{tpu_custom_call.1} parent=31 // pred_check
          %p184 = pneg %p37
        $region34: #{tpu_custom_call.1} parent=31 // pred_check_branch
          %186 = sbr.rel (%p184) target = $region36
        $region35: #{tpu_custom_call.1} parent=31 // pred_region
          %s187 = sand.u32 %s27, 1
          %s188 = scalar_lea.sflag [#allocation3], %s187
          %s189 = sand.u32 %s27, 1
          %s190 = smul.addr %s189, 64
          %s191 = scalar_lea.vmem [#allocation2], %s190
          %s192 = smul.u32 4, %s17
          %s194 = ssub.s32 1024, 1024
          %195 = vsyncadd %s188, %s194
          %s196 = smul.addr %s192, 2
          %s197 = smul.addr %s196, 128
          %s198 = scalar_lea.hbm %s0, %s197
          %s199 = sshll.u32 %s191, 4
          %s200 = int_to_ptr.vmem [resolvable:$true] %s199
          %205 = dma.hbm_to_vmem [thread:$0]  %s198, 1024, %s200, %s188, 256, 256, 16
        $region36: #{tpu_custom_call.1} parent=31 // pred_fallthru
          _
      $region32: #{tpu_custom_call.1} parent=5 // pred_fallthru
        _
      %p206 = scmp.le.s32.totalorder 1, %s17
      %p207 = scmp.lt.s32.totalorder %s17, 3
      %p208 = pnand %p206, %p207
      %p209 = pneg %p208
      // Predicated region
      $region37: #{tpu_custom_call.1} parent=5 // pred_check
        _
      $region38: #{tpu_custom_call.1} parent=5 // pred_check_branch
        %211 = sbr.rel (%p208) target = $region40
      $region39: #{tpu_custom_call.1} parent=5 // pred_region
        %s212 = ssub.s32 %s17, 1
        %s213 = sand.u32 %s30, 1
        %s214 = scalar_lea.sflag [#allocation3], %s213
        %s215 = sand.u32 %s30, 1
        %s216 = smul.addr %s215, 64
        %s217 = scalar_lea.vmem [#allocation2], %s216
        // Predicated region
        $region41: #{tpu_custom_call.1} parent=39 // pred_check
          %p218 = pneg %p43
        $region42: #{tpu_custom_call.1} parent=39 // pred_check_branch
          %220 = sbr.rel (%p218) target = $region44
        $region43: #{tpu_custom_call.1} parent=39 // pred_region
          %221 = dma.done %s214, 1024
        $region44: #{tpu_custom_call.1} parent=39 // pred_fallthru
          _
        %s222 = sand.u32 %s30, 1
        %s223 = scalar_lea.sflag [#allocation3], %s222
        %s224 = sand.u32 %s30, 1
        %s225 = smul.addr %s224, 64
        %s226 = scalar_lea.vmem [#allocation2], %s225
        %p227 = pneg %p43
        %p228 = pneg %p40
        %p229 = pneg %p64
        %p230 = pneg %p61
        %p231 = pneg %p85
        %p232 = pneg %p82
        %p233 = pneg %p106
        %p234 = pneg %p103
        %p235 = pneg %p127
        %p236 = pneg %p124
        %p237 = pneg %p153
        %p238 = pneg %p150
        %s239 = sand.u32 %s140, 1
        %s240 = scalar_lea.sflag [#allocation4], %s239
        %s241 = sand.u32 %s140, 1
        %s242 = smul.addr %s241, 64
        %s243 = scalar_lea.vmem [#allocation5], %s242
        %s244 = smul.u32 4, %s22
        %s245 = smul.u32 4, %s22
        %v246 = vld [vmem:[%s1] sm:$0xff]
        %v247 = vld [vmem:[%s2] sm:$0xff]
        %v248 = vld [vmem:[%s3] sm:$0xff]
        %v249 = vld [vmem:[%s3 + $0x8] sm:$0xff]
        %v250 = vld [vmem:[%s3 + $0x10] sm:$0xff]
        %v251 = vld [vmem:[%s3 + $0x18] sm:$0xff]
        %v252 = vld [vmem:[%s4] sm:$0xff]
        %v253 = vld [vmem:[%s4 + $0x8] sm:$0xff]
        %v254 = vld [vmem:[%s4 + $0x10] sm:$0xff]
        %v255 = vld [vmem:[%s4 + $0x18] sm:$0xff]
        %v256 = vld [vmem:[%s217] sm:$0xff]
        %v257 = vld [vmem:[%s217 + $0x8] sm:$0xff]
        %v258 = vld [vmem:[%s217 + $0x10] sm:$0xff]
        %v259 = vld [vmem:[%s217 + $0x18] sm:$0xff]
        %v260 = vld [vmem:[%s217 + $0x20] sm:$0xff]
        %v261 = vld [vmem:[%s217 + $0x28] sm:$0xff]
        %v262 = vld [vmem:[%s217 + $0x30] sm:$0xff]
        %v263 = vld [vmem:[%s217 + $0x38] sm:$0xff]
        %v264 = vadd.f32 %v256, %v257
        %265 = vadd.xlane.f32.xlu0 %v264
        %v266 = vpop.xlane.xlu0 %265
        %v267 = vadd.f32 %v258, %v259
        %268 = vadd.xlane.f32.xlu0 %v267
        %v269 = vpop.xlane.xlu0 %268
        %v270 = vadd.f32 %v260, %v261
        %271 = vadd.xlane.f32.xlu0 %v270
        %v272 = vpop.xlane.xlu0 %271
        %v273 = vadd.f32 %v262, %v263
        %274 = vadd.xlane.f32.xlu0 %v273
        %v275 = vpop.xlane.xlu0 %274
        %v276 = vmul.f32 %v266, 0.00390625
        %v277 = vmul.f32 %v269, 0.00390625
        %v278 = vmul.f32 %v272, 0.00390625
        %v279 = vmul.f32 %v275, 0.00390625
        %vm280 = vcmask 261120
        %v282 = vsel %vm280, %v246, 0
        %284 = vmatprep.subr.mxu0 0.0
        %285 = vmatpush1.msra.mxu0 %v276
        %286 = vmatprep.subr.mxu0 0.0
        %287 = vmatpush1.msra.mxu0 %v277
        %288 = vmatprep.subr.mxu0 0.0
        %289 = vmatpush1.msra.mxu0 %v278
        %290 = vmatprep.subr.mxu0 0.0
        %291 = vmatpush1.msra.mxu0 %v279
        %292 = vmatprep.subr.mxu0 0.0
        %293 = vmatpush1.msra.mxu0 0.0
        %294 = vmatprep.subr.mxu0 0.0
        %295 = vmatpush1.msra.mxu0 0.0
        %296 = vmatprep.subr.mxu0 0.0
        %297 = vmatpush1.msra.mxu0 0.0
        %298 = vmatprep.subr.mxu0 0.0
        %299 = vmatpush1.msra.mxu0 0.0
        %300 = vmatprep.subr.mxu0 0.0
        %301 = vmatpush1.msra.mxu0 0.0
        %302 = vmatprep.subr.mxu0 0.0
        %303 = vmatpush1.msra.mxu0 0.0
        %304 = vmatprep.subr.mxu0 0.0
        %305 = vmatpush1.msra.mxu0 0.0
        %306 = vmatprep.subr.mxu0 0.0
        %307 = vmatpush1.msra.mxu0 0.0
        %308 = vmatprep.subr.mxu0 0.0
        %309 = vmatpush1.msra.mxu0 0.0
        %310 = vmatprep.subr.mxu0 0.0
        %311 = vmatpush1.msra.mxu0 0.0
        %312 = vmatprep.subr.mxu0 0.0
        %313 = vmatpush1.msra.mxu0 0.0
        %314 = vmatprep.subr.mxu0 0.0
        %315 = vmatpush1.msra.mxu0 0.0
        %316 = vmatprep.subr.mxu0 0.0
        %317 = vmatpush1.msra.mxu0 0.0
        %318 = vmatprep.subr.mxu0 0.0
        %319 = vmatpush1.msra.mxu0 0.0
        %320 = vmatprep.subr.mxu0 0.0
        %321 = vmatpush1.msra.mxu0 0.0
        %322 = vmatprep.subr.mxu0 0.0
        %323 = vmatpush1.msra.mxu0 0.0
        %324 = vmatprep.subr.mxu0 0.0
        %325 = vmatpush1.msra.mxu0 0.0
        %326 = vmatprep.subr.mxu0 0.0
        %327 = vmatpush1.msra.mxu0 0.0
        %328 = vmatprep.subr.mxu0 0.0
        %329 = vmatpush1.msra.mxu0 0.0
        %330 = vmatprep.subr.mxu0 0.0
        %331 = vmatpush1.msra.mxu0 0.0
        %332 = vmatprep.subr.mxu0 0.0
        %333 = vmatpush1.msra.mxu0 0.0
        %334 = vmatprep.subr.mxu0 0.0
        %335 = vmatpush1.msra.mxu0 0.0
        %336 = vmatprep.subr.mxu0 0.0
        %337 = vmatpush1.msra.mxu0 0.0
        %338 = vmatprep.subr.mxu0 0.0
        %339 = vmatpush1.msra.mxu0 0.0
        %340 = vmatprep.subr.mxu0 0.0
        %341 = vmatpush1.msra.mxu0 0.0
        %342 = vmatprep.subr.mxu0 0.0
        %343 = vmatpush1.msra.mxu0 0.0
        %344 = vmatprep.subr.mxu0 0.0
        %345 = vmatpush1.msra.mxu0 0.0
        %346 = vmatprep.subr.mxu0 0.0
        %347 = vmatpush1.msra.mxu0 0.0
        %348 = vmatprep.mubr.f32.mxu0 0.0
        %349 = vmatmul.mubr.f32.gmra.mrb[0].mxu0 %v282
        %v350 = vpop.f32.mrb[0].mxu0
        %v351 = vadd.f32 %v247, %v350
        %v352 = vpop.f32.mrb[0].mxu0
        %353 = vdwg.mxu0
        %v354 = vmax.f32 %v351, 0.0
        %vm355 = vcmask 64512
        %v357 = vsel %vm355, %v248, 0
        %v360 = vsel %vm355, %v249, 0
        %v363 = vsel %vm355, %v250, 0
        %v366 = vsel %vm355, %v251, 0
        %368 = vmatprep.subr.mxu0 0.0
        %369 = vmatpush1.msra.mxu0 %v354
        %370 = vmatprep.subr.mxu0 0.0
        %371 = vmatpush1.msra.mxu0 0.0
        %372 = vmatprep.subr.mxu0 0.0
        %373 = vmatpush1.msra.mxu0 0.0
        %374 = vmatprep.subr.mxu0 0.0
        %375 = vmatpush1.msra.mxu0 0.0
        %376 = vmatprep.subr.mxu0 0.0
        %377 = vmatpush1.msra.mxu0 0.0
        %378 = vmatprep.subr.mxu0 0.0
        %379 = vmatpush1.msra.mxu0 0.0
        %380 = vmatprep.subr.mxu0 0.0
        %381 = vmatpush1.msra.mxu0 0.0
        %382 = vmatprep.subr.mxu0 0.0
        %383 = vmatpush1.msra.mxu0 0.0
        %384 = vmatprep.subr.mxu0 0.0
        %385 = vmatpush1.msra.mxu0 0.0
        %386 = vmatprep.subr.mxu0 0.0
        %387 = vmatpush1.msra.mxu0 0.0
        %388 = vmatprep.subr.mxu0 0.0
        %389 = vmatpush1.msra.mxu0 0.0
        %390 = vmatprep.subr.mxu0 0.0
        %391 = vmatpush1.msra.mxu0 0.0
        %392 = vmatprep.subr.mxu0 0.0
        %393 = vmatpush1.msra.mxu0 0.0
        %394 = vmatprep.subr.mxu0 0.0
        %395 = vmatpush1.msra.mxu0 0.0
        %396 = vmatprep.subr.mxu0 0.0
        %397 = vmatpush1.msra.mxu0 0.0
        %398 = vmatprep.subr.mxu0 0.0
        %399 = vmatpush1.msra.mxu0 0.0
        %400 = vmatprep.subr.mxu0 0.0
        %401 = vmatpush1.msra.mxu0 0.0
        %402 = vmatprep.subr.mxu0 0.0
        %403 = vmatpush1.msra.mxu0 0.0
        %404 = vmatprep.subr.mxu0 0.0
        %405 = vmatpush1.msra.mxu0 0.0
        %406 = vmatprep.subr.mxu0 0.0
        %407 = vmatpush1.msra.mxu0 0.0
        %408 = vmatprep.subr.mxu0 0.0
        %409 = vmatpush1.msra.mxu0 0.0
        %410 = vmatprep.subr.mxu0 0.0
        %411 = vmatpush1.msra.mxu0 0.0
        %412 = vmatprep.subr.mxu0 0.0
        %413 = vmatpush1.msra.mxu0 0.0
        %414 = vmatprep.subr.mxu0 0.0
        %415 = vmatpush1.msra.mxu0 0.0
        %416 = vmatprep.subr.mxu0 0.0
        %417 = vmatpush1.msra.mxu0 0.0
        %418 = vmatprep.subr.mxu0 0.0
        %419 = vmatpush1.msra.mxu0 0.0
        %420 = vmatprep.subr.mxu0 0.0
        %421 = vmatpush1.msra.mxu0 0.0
        %422 = vmatprep.subr.mxu0 0.0
        %423 = vmatpush1.msra.mxu0 0.0
        %424 = vmatprep.subr.mxu0 0.0
        %425 = vmatpush1.msra.mxu0 0.0
        %426 = vmatprep.subr.mxu0 0.0
        %427 = vmatpush1.msra.mxu0 0.0
        %428 = vmatprep.subr.mxu0 0.0
        %429 = vmatpush1.msra.mxu0 0.0
        %430 = vmatprep.subr.mxu0 0.0
        %431 = vmatpush1.msra.mxu0 0.0
        %432 = vmatprep.mubr.f32.mxu0 0.0
        %433 = vmatmul.mubr.f32.gmra.mrb[0].mxu0 %v357
        %v434 = vpop.f32.mrb[0].mxu0
        %v435 = vadd.f32 %v252, %v434
        %v436 = vpop.f32.mrb[0].mxu0
        %437 = vmatprep.mubr.f32.mxu0 0.0
        %438 = vmatmul.mubr.f32.gmra.mrb[0].mxu0 %v360
        %v439 = vpop.f32.mrb[0].mxu0
        %v440 = vadd.f32 %v253, %v439
        %v441 = vpop.f32.mrb[0].mxu0
        %442 = vmatprep.mubr.f32.mxu0 0.0
        %443 = vmatmul.mubr.f32.gmra.mrb[0].mxu0 %v363
        %v444 = vpop.f32.mrb[0].mxu0
        %v445 = vadd.f32 %v254, %v444
        %v446 = vpop.f32.mrb[0].mxu0
        %447 = vmatprep.mubr.f32.mxu0 0.0
        %448 = vmatmul.mubr.f32.gmra.mrb[0].mxu0 %v366
        %v449 = vpop.f32.mrb[0].mxu0
        %v450 = vadd.f32 %v255, %v449
        %v451 = vpop.f32.mrb[0].mxu0
        %452 = vdwg.mxu0
        %v453 = vxor.u32 %v435, 2147483648
        %v454 = vxor.u32 %v440, 2147483648
        %v455 = vxor.u32 %v445, 2147483648
        %v456 = vxor.u32 %v450, 2147483648
        %v457 = vmul.f32 %v453, 1.442695
        %v458 = vpow.pop %v457
        %v459 = vmul.f32 %v454, 1.442695
        %v460 = vpow.pop %v459
        %v461 = vmul.f32 %v455, 1.442695
        %v462 = vpow.pop %v461
        %v463 = vmul.f32 %v456, 1.442695
        %v464 = vpow.pop %v463
        %v465 = vadd.f32 %v458, 1.0
        %v466 = vadd.f32 %v460, 1.0
        %v467 = vadd.f32 %v462, 1.0
        %v468 = vadd.f32 %v464, 1.0
        %v469 = vrcp.pop %v465
        %v470 = vmul.f32 1.0, %v469
        %v471 = vrcp.pop %v466
        %v472 = vmul.f32 1.0, %v471
        %v473 = vrcp.pop %v467
        %v474 = vmul.f32 1.0, %v473
        %v475 = vrcp.pop %v468
        %v476 = vmul.f32 1.0, %v475
        %478 = vset.pattern.permute.xlu0 0
        %479 = vperm.xlu0 %478, %v470
        %v480 = vpop.permute.xlu0 %479
        %483 = vset.pattern.permute.xlu0 0
        %484 = vperm.xlu0 %483, %v472
        %v485 = vpop.permute.xlu0 %484
        %488 = vset.pattern.permute.xlu0 0
        %489 = vperm.xlu0 %488, %v474
        %v490 = vpop.permute.xlu0 %489
        %493 = vset.pattern.permute.xlu0 0
        %494 = vperm.xlu0 %493, %v476
        %v495 = vpop.permute.xlu0 %494
        %v497 = vmul.f32 %v256, %v480
        %v498 = vmul.f32 %v257, %v480
        %v499 = vmul.f32 %v258, %v485
        %v500 = vmul.f32 %v259, %v485
        %v501 = vmul.f32 %v260, %v490
        %v502 = vmul.f32 %v261, %v490
        %v503 = vmul.f32 %v262, %v495
        %v504 = vmul.f32 %v263, %v495
        %505 = vst [vmem:[%s243] sm:$0xff] %v497
        %506 = vst [vmem:[%s243 + $0x8] sm:$0xff] %v498
        %507 = vst [vmem:[%s243 + $0x10] sm:$0xff] %v499
        %508 = vst [vmem:[%s243 + $0x18] sm:$0xff] %v500
        %509 = vst [vmem:[%s243 + $0x20] sm:$0xff] %v501
        %510 = vst [vmem:[%s243 + $0x28] sm:$0xff] %v502
        %511 = vst [vmem:[%s243 + $0x30] sm:$0xff] %v503
        %512 = vst [vmem:[%s243 + $0x38] sm:$0xff] %v504
        %s513 = sand.u32 %s140, 1
        %s514 = scalar_lea.sflag [#allocation4], %s513
        %s515 = sand.u32 %s140, 1
        %s516 = smul.addr %s515, 64
        %s517 = scalar_lea.vmem [#allocation5], %s516
        // Predicated region
        $region45: #{tpu_custom_call.1} parent=39 // pred_check
          %p518 = pneg %p150
        $region46: #{tpu_custom_call.1} parent=39 // pred_check_branch
          %520 = sbr.rel (%p518) target = $region48
        $region47: #{tpu_custom_call.1} parent=39 // pred_region
          %s521 = smul.u32 4, %s22
          %s523 = ssub.s32 1024, 1024
          %524 = vsyncadd %s514, %s523
          %s525 = smul.addr %s521, 2
          %s526 = smul.addr %s525, 128
          %s527 = scalar_lea.hbm %s5, %s526
          %s528 = sshll.u32 %s517, 4
          %s529 = int_to_ptr.vmem [resolvable:$true] %s528
          %534 = dma.vmem_to_hbm [thread:$0]  %s529, 1024, %s527, %s514, 256, 256, 16
        $region48: #{tpu_custom_call.1} parent=39 // pred_fallthru
          _
      $region40: #{tpu_custom_call.1} parent=5 // pred_fallthru
        _
      %p535 = scmp.le.s32.totalorder 2, %s17
      // Predicated region
      $region49: #{tpu_custom_call.1} parent=5 // pred_check
        %p536 = pneg %p535
      $region50: #{tpu_custom_call.1} parent=5 // pred_check_branch
        %538 = sbr.rel (%p536) target = $region52
      $region51: #{tpu_custom_call.1} parent=5 // pred_region
        %s539 = ssub.s32 %s17, 2
        // Predicated region
        $region53: #{tpu_custom_call.1} parent=51 // pred_check
          %p540 = pneg %p156
        $region54: #{tpu_custom_call.1} parent=51 // pred_check_branch
          %542 = sbr.rel (%p540) target = $region56
        $region55: #{tpu_custom_call.1} parent=51 // pred_region
          %s543 = sand.u32 %s141, 1
          %s544 = scalar_lea.sflag [#allocation4], %s543
          %s545 = sand.u32 %s141, 1
          %s546 = smul.addr %s545, 64
          %s547 = scalar_lea.vmem [#allocation5], %s546
          %548 = dma.done %s544, 1024
        $region56: #{tpu_custom_call.1} parent=51 // pred_fallthru
          _
      $region52: #{tpu_custom_call.1} parent=5 // pred_fallthru
        _
    $region6: #{tpu_custom_call.1} parent=1 // loop_footer
      %s21 = sadd.s32 1, %s17
    $region7: #{tpu_custom_call.1} parent=1 // loop_footer_branch
      %16 = sbr.rel target = $region3
    $region8: #{tpu_custom_call.1} parent=1 // loop_exit
      _
    %549 = vsyncpa [#allocation3], 1
    %s550 = scalar_lea.sflag [#allocation3], 1
    %551 = vsyncpa %s550, 1
    %552 = vsyncpa [#allocation4], 1
    %s553 = scalar_lea.sflag [#allocation4], 1
    %554 = vsyncpa %s553, 1

</llo_original>
